<compile_context>
chip_gen: v7x
topology: tpu7x:2x2x1
jax: 0.10.0
libtpu: 0.0.40
codegen_flags: <defaults>
</compile_context>

<pallas_src>
import math

import jax
import jax.numpy as jnp
import numpy as np
from jax.experimental import pallas as pl
from jax.experimental.pallas import tpu as pltpu


def _channel_attention_kernel(params_ref, f1_ref, f2_ref, out_ref):
    # params layout (SMEM, f32[8]):
    #   [0] w1_00  [1] w1_01  [2] b1_0              (Linear(2 -> 1))
    #   [3] w2_00  [4] w2_10  [5] b2_0  [6] b2_1    (Linear(1 -> 2))
    #   [7] unused padding
    f1 = f1_ref[...]  # [TB, D], native dtype (f32 or bf16)
    f2 = f2_ref[...]  # [TB, D]
    d = f1.shape[-1]
    inv_d = jnp.float32(1.0 / d)

    # Channel pooling over the full proj_dim D (D is whole per block, so the
    # reductions are exact). Sums are accumulated in f32 even for bf16 inputs.
    avg1 = jnp.sum(f1, axis=-1, keepdims=True, dtype=jnp.float32) * inv_d  # [TB,1]
    avg2 = jnp.sum(f2, axis=-1, keepdims=True, dtype=jnp.float32) * inv_d  # [TB,1]
    max1 = jnp.max(f1, axis=-1, keepdims=True).astype(jnp.float32)         # [TB,1]
    max2 = jnp.max(f2, axis=-1, keepdims=True).astype(jnp.float32)         # [TB,1]

    w1_00 = params_ref[0]
    w1_01 = params_ref[1]
    b1_0 = params_ref[2]
    w2_00 = params_ref[3]
    w2_10 = params_ref[4]
    b2_0 = params_ref[5]
    b2_1 = params_ref[6]

    # Shared MLP (2 -> 1 -> 2) on the pooled channel descriptors. Kept as
    # scalar/VPU broadcast math on [TB, 1] columns — routing 7 scalars through
    # the MXU would only add drain latency; HBM DMA is the binding resource.
    # NOTE: f1/f2 are each read three times (mean, max, final scale); fuse the
    # sum+max passes only if a bundle dump shows the vld slot saturating.
    h_avg = jnp.maximum(avg1 * w1_00 + avg2 * w1_01 + b1_0, 0.0)  # [TB, 1]
    h_max = jnp.maximum(max1 * w1_00 + max2 * w1_01 + b1_0, 0.0)  # [TB, 1]

    avg_out0 = h_avg * w2_00 + b2_0
    avg_out1 = h_avg * w2_10 + b2_1
    max_out0 = h_max * w2_00 + b2_0
    max_out1 = h_max * w2_10 + b2_1

    # Channel attention weights (sigmoid -> EUP slot, essentially free).
    cw0 = jax.nn.sigmoid(avg_out0 + max_out0)  # [TB, 1] f32
    cw1 = jax.nn.sigmoid(avg_out1 + max_out1)  # [TB, 1] f32

    # Final weighted fusion in the native input dtype (bf16 VALU on v6e/v7x;
    # Mosaic legalizes to f32 on v5e automatically). No-op cast for f32 inputs.
    out_ref[...] = (cw0.astype(f1.dtype) * f1
                    + cw1.astype(f2.dtype) * f2).astype(out_ref.dtype)


def _round_up(x, m):
    return ((x + m - 1) // m) * m


def _tpu_vmem_capacity_bytes():
    """Physical VMEM per TensorCore; conservative (v7x-sized) fallback."""
    try:
        return int(pltpu.get_tpu_info().vmem_capacity_bytes)
    except Exception:
        return 64 << 20


def _feat_block_spec(tb, d, n_buf):
    """Input BlockSpec; triple-buffered when requested and supported."""
    if n_buf > 2:
        try:
            return pl.BlockSpec((tb, d), lambda i: (i, 0),
                                pipeline_mode=pl.Buffered(n_buf))
        except Exception:
            pass  # older Pallas without pipeline_mode -> default double-buffer
    return pl.BlockSpec((tb, d), lambda i: (i, 0))


_MAX_BUF_IN = 3   # triple-buffer inputs when the grid is long enough
_BUF_OUT = 2      # default double-buffer for the output stream


def _choose_tile_b(B, D, itemsize, vmem_cap):
    """Batch tile size: whole array for tiny B; otherwise a multiple of 8 rows
    sized so the pipelined working set (2 inputs x max buffers + 1 output x 2
    buffers of one tile each) uses roughly half of physical VMEM, with the
    tiles balanced so the last grid step isn't nearly empty."""
    if B <= 8:
        return int(B)
    streams = 2 * _MAX_BUF_IN + _BUF_OUT
    tile_budget = (vmem_cap // 2) // streams
    tile_budget = int(min(max(tile_budget, 1 << 20), 16 << 20))
    rows = tile_budget // max(1, D * itemsize)
    rows = max(8, (rows // 8) * 8)
    if rows >= B:
        return int(B)  # single tile; block == full array dim is always legal
    n_tiles = math.ceil(B / rows)
    tb = _round_up(math.ceil(B / n_tiles), 8)  # balanced, multiple of 8
    return int(tb)


def channel_attention_1d(feat1, feat2, params):
    """feat1, feat2: [B, D] (f32 or bf16); params: f32[8] flattened MLP weights."""
    B, D = feat1.shape
    itemsize = jnp.dtype(feat1.dtype).itemsize
    vmem_cap = _tpu_vmem_capacity_bytes()

    TB = _choose_tile_b(B, D, itemsize, vmem_cap)
    num_tiles = int(pl.cdiv(B, TB))
    grid = (num_tiles,)

    # Only bother with a 3rd input buffer when there is a real pipeline.
    n_buf_in = _MAX_BUF_IN if num_tiles >= 3 else 2

    tile_bytes = TB * D * itemsize
    working_set = (2 * n_buf_in + _BUF_OUT) * tile_bytes
    vmem_limit = max(16 << 20, (working_set * 5) // 4)     # 1.25x working set
    vmem_limit = int(min(vmem_limit, vmem_cap - (8 << 20)))  # compiler headroom

    feat_spec = _feat_block_spec(TB, D, n_buf_in)
    out_spec = pl.BlockSpec((TB, D), lambda i: (i, 0))

    cost = pl.CostEstimate(
        flops=int(10 * B * D),                  # pooling + weighted fusion
        transcendentals=int(2 * B),             # 2 sigmoids per row
        bytes_accessed=int(3 * B * D * itemsize + params.size * 4),
    )

    def build(batch_sem):
        return pl.pallas_call(
            _channel_attention_kernel,
            out_shape=jax.ShapeDtypeStruct((B, D), feat1.dtype),
            grid=grid,
            in_specs=[
                # Tiny MLP params live in SMEM for the whole kernel.
                pl.BlockSpec(memory_space=pltpu.MemorySpace.SMEM),
                feat_spec,  # feat1 tile [TB, D]
                feat_spec,  # feat2 tile [TB, D]
            ],
            out_specs=out_spec,
            compiler_params=pltpu.CompilerParams(
                dimension_semantics=(batch_sem,),
                vmem_limit_bytes=vmem_limit,
            ),
            cost_estimate=cost,
        )

    # On v7x-like chips (<=64 MiB VMEM per TC, 2 TensorCores) with enough
    # tiles, shard the batch grid axis across both cores; each core has its
    # own HBM path, so this memory-bound kernel can approach 2x. Fall back to
    # plain "parallel" if the chip/compiler rejects CORE_PARALLEL.
    use_core_parallel = (vmem_cap <= (96 << 20)) and num_tiles >= 4
    if use_core_parallel:
        try:
            return build(pltpu.CORE_PARALLEL)(params, feat1, feat2)
        except Exception:
            pass
    return build("parallel")(params, feat1, feat2)


def _reference(feat1, feat2, params):
    """Pure-JAX reference matching the PyTorch forward exactly."""
    w1 = params[0:2].reshape(1, 2)   # Linear(2,1).weight
    b1 = params[2:3]                 # Linear(2,1).bias
    w2 = params[3:5].reshape(2, 1)   # Linear(1,2).weight
    b2 = params[5:7]                 # Linear(1,2).bias
    combined = jnp.stack([feat1, feat2], axis=1)             # [B, 2, D]
    avg = jnp.mean(combined, axis=-1)                        # [B, 2]
    mx = jnp.max(combined, axis=-1)                          # [B, 2]

    def mlp(x):
        h = jnp.maximum(x @ w1.T + b1, 0.0)
        return h @ w2.T + b2

    cw = jax.nn.sigmoid(mlp(avg) + mlp(mx))                  # [B, 2]
    return cw[:, 0:1] * feat1 + cw[:, 1:2] * feat2


if __name__ == "__main__":
    key = jax.random.PRNGKey(0)
    k1, k2, k3, k4, k5 = jax.random.split(key, 5)

    # Deterministic MLP params: Linear(2,1) + Linear(1,2), flattened to f32[8]
    # [w1_00, w1_01, b1_0, w2_00, w2_10, b2_0, b2_1, pad]
    raw = jax.random.uniform(k3, (7,), dtype=jnp.float32, minval=-0.5, maxval=0.5)
    params = jnp.concatenate([raw, jnp.zeros((1,), jnp.float32)])

    # Case 1: the module's native tiny shape (B=2, proj_dim=16).
    B1, D1 = 2, 16
    f1a = jax.random.normal(k1, (B1, D1), dtype=jnp.float32)
    f2a = jax.random.normal(k2, (B1, D1), dtype=jnp.float32)
    out_a = jax.block_until_ready(channel_attention_1d(f1a, f2a, params))
    ref_a = _reference(f1a, f2a, params)
    np.testing.assert_allclose(np.asarray(out_a), np.asarray(ref_a),
                               rtol=1e-5, atol=1e-5)

    # Case 2: a larger, lane-dense batch exercising the byte-driven tiling
    # path (D a multiple of 128, B not a multiple of the tile size).
    B2, D2 = 2056, 128
    f1b = jax.random.normal(k4, (B2, D2), dtype=jnp.float32)
    f2b = jax.random.normal(k5, (B2, D2), dtype=jnp.float32)
    out_b = jax.block_until_ready(channel_attention_1d(f1b, f2b, params))
    ref_b = _reference(f1b, f2b, params)
    np.testing.assert_allclose(np.asarray(out_b), np.asarray(ref_b),
                               rtol=1e-5, atol=1e-5)

    # Case 3: bf16 ingestion path (halved HBM traffic; f32 pooled accumulation).
    f1c = f1b.astype(jnp.bfloat16)
    f2c = f2b.astype(jnp.bfloat16)
    out_c = jax.block_until_ready(channel_attention_1d(f1c, f2c, params))
    ref_c = _reference(f1c.astype(jnp.float32), f2c.astype(jnp.float32), params)
    np.testing.assert_allclose(np.asarray(out_c, dtype=np.float32),
                               np.asarray(ref_c), rtol=2e-2, atol=2e-2)

    print("KERNEL_OK")
</pallas_src>

<mosaic_0001>
module attributes {stable_mosaic.version = 11 : i64} {
  func.func @_channel_attention_kernel(%arg0: i32, %arg1: memref<8xf32, #tpu.memory_space<smem>>, %arg2: memref<2x16xf32, #tpu.memory_space<vmem>>, %arg3: memref<2x16xf32, #tpu.memory_space<vmem>>, %arg4: memref<2x16xf32, #tpu.memory_space<vmem>>) attributes {dimension_semantics = [#tpu.dimension_semantics<parallel>], iteration_bounds = array<i64: 1>, scalar_prefetch = 0 : i64, scratch_operands = 0 : i64, tpu.core_type = #tpu.core_type<tc>, window_params = [{transform_indices = @transform_0, window_bounds = array<i64: 8>}, {transform_indices = @transform_1, window_bounds = array<i64: 2, 16>}, {transform_indices = @transform_2, window_bounds = array<i64: 2, 16>}, {transform_indices = @transform_3, window_bounds = array<i64: 2, 16>}]} {
    %c0 = arith.constant 0 : index
    %c0_0 = arith.constant 0 : index
    %0 = vector.load %arg2[%c0, %c0_0] : memref<2x16xf32, #tpu.memory_space<vmem>>, vector<2x16xf32>
    %c0_1 = arith.constant 0 : index
    %c0_2 = arith.constant 0 : index
    %1 = vector.load %arg3[%c0_1, %c0_2] : memref<2x16xf32, #tpu.memory_space<vmem>>, vector<2x16xf32>
    %cst = arith.constant dense<0.000000e+00> : vector<2xf32>
    %2 = vector.multi_reduction <add>, %0, %cst [1] : vector<2x16xf32> to vector<2xf32>
    %3 = vector.shape_cast %2 : vector<2xf32> to vector<2x1xf32>
    %cst_3 = arith.constant 6.250000e-02 : f32
    %4 = vector.broadcast %cst_3 : f32 to vector<2x1xf32>
    %5 = arith.mulf %3, %4 : vector<2x1xf32>
    %cst_4 = arith.constant dense<0.000000e+00> : vector<2xf32>
    %6 = vector.multi_reduction <add>, %1, %cst_4 [1] : vector<2x16xf32> to vector<2xf32>
    %7 = vector.shape_cast %6 : vector<2xf32> to vector<2x1xf32>
    %cst_5 = arith.constant 6.250000e-02 : f32
    %8 = vector.broadcast %cst_5 : f32 to vector<2x1xf32>
    %9 = arith.mulf %7, %8 : vector<2x1xf32>
    %cst_6 = arith.constant dense<0xFF800000> : vector<2xf32>
    %10 = vector.multi_reduction <maximumf>, %0, %cst_6 [1] : vector<2x16xf32> to vector<2xf32>
    %11 = vector.shape_cast %10 : vector<2xf32> to vector<2x1xf32>
    %cst_7 = arith.constant dense<0xFF800000> : vector<2xf32>
    %12 = vector.multi_reduction <maximumf>, %1, %cst_7 [1] : vector<2x16xf32> to vector<2xf32>
    %13 = vector.shape_cast %12 : vector<2xf32> to vector<2x1xf32>
    %c0_8 = arith.constant 0 : index
    %14 = memref.load %arg1[%c0_8] : memref<8xf32, #tpu.memory_space<smem>>
    %c1 = arith.constant 1 : index
    %15 = memref.load %arg1[%c1] : memref<8xf32, #tpu.memory_space<smem>>
    %c2 = arith.constant 2 : index
    %16 = memref.load %arg1[%c2] : memref<8xf32, #tpu.memory_space<smem>>
    %c3 = arith.constant 3 : index
    %17 = memref.load %arg1[%c3] : memref<8xf32, #tpu.memory_space<smem>>
    %c4 = arith.constant 4 : index
    %18 = memref.load %arg1[%c4] : memref<8xf32, #tpu.memory_space<smem>>
    %c5 = arith.constant 5 : index
    %19 = memref.load %arg1[%c5] : memref<8xf32, #tpu.memory_space<smem>>
    %c6 = arith.constant 6 : index
    %20 = memref.load %arg1[%c6] : memref<8xf32, #tpu.memory_space<smem>>
    %21 = vector.broadcast %14 : f32 to vector<2x1xf32>
    %22 = arith.mulf %5, %21 : vector<2x1xf32>
    %23 = vector.broadcast %15 : f32 to vector<2x1xf32>
    %24 = arith.mulf %9, %23 : vector<2x1xf32>
    %25 = arith.addf %22, %24 : vector<2x1xf32>
    %26 = vector.broadcast %16 : f32 to vector<2x1xf32>
    %27 = arith.addf %25, %26 : vector<2x1xf32>
    %cst_9 = arith.constant 0.000000e+00 : f32
    %28 = vector.broadcast %cst_9 : f32 to vector<2x1xf32>
    %29 = arith.maximumf %27, %28 : vector<2x1xf32>
    %30 = vector.broadcast %14 : f32 to vector<2x1xf32>
    %31 = arith.mulf %11, %30 : vector<2x1xf32>
    %32 = vector.broadcast %15 : f32 to vector<2x1xf32>
    %33 = arith.mulf %13, %32 : vector<2x1xf32>
    %34 = arith.addf %31, %33 : vector<2x1xf32>
    %35 = vector.broadcast %16 : f32 to vector<2x1xf32>
    %36 = arith.addf %34, %35 : vector<2x1xf32>
    %cst_10 = arith.constant 0.000000e+00 : f32
    %37 = vector.broadcast %cst_10 : f32 to vector<2x1xf32>
    %38 = arith.maximumf %36, %37 : vector<2x1xf32>
    %39 = vector.broadcast %17 : f32 to vector<2x1xf32>
    %40 = arith.mulf %29, %39 : vector<2x1xf32>
    %41 = vector.broadcast %19 : f32 to vector<2x1xf32>
    %42 = arith.addf %40, %41 : vector<2x1xf32>
    %43 = vector.broadcast %18 : f32 to vector<2x1xf32>
    %44 = arith.mulf %29, %43 : vector<2x1xf32>
    %45 = vector.broadcast %20 : f32 to vector<2x1xf32>
    %46 = arith.addf %44, %45 : vector<2x1xf32>
    %47 = vector.broadcast %17 : f32 to vector<2x1xf32>
    %48 = arith.mulf %38, %47 : vector<2x1xf32>
    %49 = vector.broadcast %19 : f32 to vector<2x1xf32>
    %50 = arith.addf %48, %49 : vector<2x1xf32>
    %51 = vector.broadcast %18 : f32 to vector<2x1xf32>
    %52 = arith.mulf %38, %51 : vector<2x1xf32>
    %53 = vector.broadcast %20 : f32 to vector<2x1xf32>
    %54 = arith.addf %52, %53 : vector<2x1xf32>
    %55 = arith.addf %42, %50 : vector<2x1xf32>
    %56 = arith.negf %55 : vector<2x1xf32>
    %57 = math.exp %56 : vector<2x1xf32>
    %cst_11 = arith.constant 1.000000e+00 : f32
    %58 = vector.broadcast %cst_11 : f32 to vector<2x1xf32>
    %59 = arith.addf %58, %57 : vector<2x1xf32>
    %60 = arith.divf %58, %59 : vector<2x1xf32>
    %61 = arith.addf %46, %54 : vector<2x1xf32>
    %62 = arith.negf %61 : vector<2x1xf32>
    %63 = math.exp %62 : vector<2x1xf32>
    %cst_12 = arith.constant 1.000000e+00 : f32
    %64 = vector.broadcast %cst_12 : f32 to vector<2x1xf32>
    %65 = arith.addf %64, %63 : vector<2x1xf32>
    %66 = arith.divf %64, %65 : vector<2x1xf32>
    %67 = vector.broadcast %60 : vector<2x1xf32> to vector<2x16xf32>
    %68 = arith.mulf %67, %0 : vector<2x16xf32>
    %69 = vector.broadcast %66 : vector<2x1xf32> to vector<2x16xf32>
    %70 = arith.mulf %69, %1 : vector<2x16xf32>
    %71 = arith.addf %68, %70 : vector<2x16xf32>
    %c0_13 = arith.constant 0 : index
    %c0_14 = arith.constant 0 : index
    %72 = vector.load %arg4[%c0_13, %c0_14] : memref<2x16xf32, #tpu.memory_space<vmem>>, vector<2x16xf32>
    tpu.vector_store %arg4[%c0_13, %c0_14], %71 {strides = array<i32>} : memref<2x16xf32, #tpu.memory_space<vmem>>, vector<2x16xf32>,
    return
  }
  func.func @transform_0(%arg0: i32) -> i32 {
    %c0_i32 = arith.constant 0 : i32
    %c0_i32_0 = arith.constant 0 : i32
    return %c0_i32 : i32
  }
  func.func @transform_1(%arg0: i32) -> (i32, i32) {
    %c0_i32 = arith.constant 0 : i32
    %c0_i32_0 = arith.constant 0 : i32
    return %arg0, %c0_i32 : i32, i32
  }
  func.func @transform_2(%arg0: i32) -> (i32, i32) {
    %c0_i32 = arith.constant 0 : i32
    %c0_i32_0 = arith.constant 0 : i32
    return %arg0, %c0_i32 : i32, i32
  }
  func.func @transform_3(%arg0: i32) -> (i32, i32) {
    %c0_i32 = arith.constant 0 : i32
    %c0_i32_0 = arith.constant 0 : i32
    return %arg0, %c0_i32 : i32, i32
  }
}

</mosaic_0001>

<llo_original>
// kernel: tpu_custom_call.1
$region0: #{tpu_custom_call.1}
  #allocation0 [shape = 'u32[]', space=smem, size = 0x4, offset = 0x4, fixed_abs, tag = 'smem constant byte address 0x4 - core index']
  #allocation1 [shape = 'u32[144,128]{1,0:T(1,128)}', space=vmem, size = 0x12000, scoped, tag = 'internal scratch']
  %s0 = inlined_call_operand.hbm [shape: f32[8], index: 0, kind: input, shape index: {}]
  %s1 = inlined_call_operand.vmem [shape: f32[2,16], index: 1, kind: input, shape index: {}]
  %s2 = inlined_call_operand.vmem [shape: f32[2,16], index: 2, kind: input, shape index: {}]
  %s3 = inlined_call_operand.hbm [shape: f32[2,16], index: 3, kind: output, shape index: {}]
  %s4 = sld [smem:[#allocation0]]
  $region26: #{tpu_custom_call.1} parent=0
    _
  %s6 = ssub.s32 1, %s4
  %s7 = scalar_select 0, %s6, %s4
  $region1: #{tpu_custom_call.1} parent=0
    #allocation2 [shape = 'u8[512]{0}', space=smem, size = 0x200, scoped, tag = 'input window, operand 0, single buffered']
    #allocation3 [shape = 's32[1]{0}', space=sflag, size = 0x4, scoped, tag = 'scoped memory for tpu_custom_call.1']
    #allocation4 [shape = 's32[1]{0}', space=sflag, size = 0x4, scoped, tag = 'scoped memory for tpu_custom_call.1']
    #allocation5 [shape = 'u8[1024]{0}', space=vmem, size = 0x400, scoped, tag = 'output window, operand 0, single buffered']
    %8 = vsyncpa [#allocation4], 0
    %9 = vsyncpa [#allocation3], 0
    // Predicated region
    $region2: #{tpu_custom_call.1} parent=1 // pred_check
      _
    $region3: #{tpu_custom_call.1} parent=1 // pred_check_branch
      %11 = sbr.rel (0) target = $region5
    $region4: #{tpu_custom_call.1} parent=1 // pred_region
      %s13 = ssub.s32 16, 16
      %14 = vsyncadd [#allocation4], %s13
      %17 = dma.hbm_to_smem %s0, 16, [#allocation2], [#allocation4]
    $region5: #{tpu_custom_call.1} parent=1 // pred_fallthru
      _
    // Predicated region
    $region6: #{tpu_custom_call.1} parent=1 // pred_check
      _
    $region7: #{tpu_custom_call.1} parent=1 // pred_check_branch
      %19 = sbr.rel (0) target = $region9
    $region8: #{tpu_custom_call.1} parent=1 // pred_region
      _
    $region9: #{tpu_custom_call.1} parent=1 // pred_fallthru
      _
    // Predicated region
    $region10: #{tpu_custom_call.1} parent=1 // pred_check
      _
    $region11: #{tpu_custom_call.1} parent=1 // pred_check_branch
      %21 = sbr.rel (0) target = $region13
    $region12: #{tpu_custom_call.1} parent=1 // pred_region
      _
    $region13: #{tpu_custom_call.1} parent=1 // pred_fallthru
      _
    // Predicated region
    $region14: #{tpu_custom_call.1} parent=1 // pred_check
      _
    $region15: #{tpu_custom_call.1} parent=1 // pred_check_branch
      %23 = sbr.rel (0) target = $region17
    $region16: #{tpu_custom_call.1} parent=1 // pred_region
      %24 = dma.done [#allocation4], 16
    $region17: #{tpu_custom_call.1} parent=1 // pred_fallthru
      _
    %25 = sfence
    %v26 = vld [vmem:[%s1] sm:$0x3]
    %v27 = vld [vmem:[%s2] sm:$0x3]
    %vm28 = vcmask 123904
    %v29 = vsel %vm28, %v26, 0.0
    %30 = vadd.xlane.f32.xlu0 %v29
    %v31 = vpop.xlane.xlu0 %30
    %v32 = vmul.f32 %v31, 0.0625
    %v33 = vsel %vm28, %v27, 0.0
    %34 = vadd.xlane.f32.xlu0 %v33
    %v35 = vpop.xlane.xlu0 %34
    %v36 = vmul.f32 %v35, 0.0625
    %v37 = vsel %vm28, %v26, -inf
    %38 = vmax.xlane.f32.xlu0 %v37
    %v39 = vpop.xlane.xlu0 %38
    %v40 = vsel %vm28, %v27, -inf
    %41 = vmax.xlane.f32.xlu0 %v40
    %v42 = vpop.xlane.xlu0 %41
    %s43 = sld [smem:[#allocation2]]
    %s44 = sld [smem:[#allocation2 + $0x1]]
    %s45 = sld [smem:[#allocation2 + $0x2]]
    %s46 = sld [smem:[#allocation2 + $0x3]]
    %s47 = sld [smem:[#allocation2 + $0x4]]
    %s48 = sld [smem:[#allocation2 + $0x5]]
    %s49 = sld [smem:[#allocation2 + $0x6]]
    %v50 = vstv %s43
    %v51 = vmul.f32 %v32, %v50
    %v52 = vstv %s44
    %v53 = vmul.f32 %v36, %v52
    %v54 = vadd.f32 %v51, %v53
    %v55 = vstv %s45
    %v56 = vadd.f32 %v54, %v55
    %v57 = vmax.f32 %v56, 0.0
    %v58 = vmul.f32 %v39, %v50
    %v59 = vmul.f32 %v42, %v52
    %v60 = vadd.f32 %v58, %v59
    %v61 = vadd.f32 %v60, %v55
    %v62 = vmax.f32 %v61, 0.0
    %v63 = vstv %s46
    %v64 = vmul.f32 %v57, %v63
    %v65 = vstv %s48
    %v66 = vadd.f32 %v64, %v65
    %v67 = vstv %s47
    %v68 = vmul.f32 %v57, %v67
    %v69 = vstv %s49
    %v70 = vadd.f32 %v68, %v69
    %v71 = vmul.f32 %v62, %v63
    %v72 = vadd.f32 %v71, %v65
    %v73 = vmul.f32 %v62, %v67
    %v74 = vadd.f32 %v73, %v69
    %v75 = vadd.f32 %v66, %v72
    %v76 = vxor.u32 %v75, 2147483648
    %v77 = vmul.f32 %v76, 1.442695
    %v78 = vpow.pop %v77
    %v79 = vadd.f32 %v78, 1.0
    %v80 = vrcp.pop %v79
    %v81 = vmul.f32 1.0, %v80
    %v82 = vadd.f32 %v70, %v74
    %v83 = vxor.u32 %v82, 2147483648
    %v84 = vmul.f32 %v83, 1.442695
    %v85 = vpow.pop %v84
    %v86 = vadd.f32 %v85, 1.0
    %v87 = vrcp.pop %v86
    %v88 = vmul.f32 1.0, %v87
    %v89 = vmul.f32 %v81, %v26
    %v90 = vmul.f32 %v88, %v27
    %v91 = vadd.f32 %v89, %v90
    %92 = vst.msk [vmem:[#allocation5] sm:$0x3] %vm28, %v91
    // Predicated region
    $region18: #{tpu_custom_call.1} parent=1 // pred_check
      _
    $region19: #{tpu_custom_call.1} parent=1 // pred_check_branch
      %94 = sbr.rel (0) target = $region21
    $region20: #{tpu_custom_call.1} parent=1 // pred_region
      %s96 = ssub.s32 32, 32
      %97 = vsyncadd [#allocation3], %s96
      %s99 = sshll.u32 [#allocation5], 4
      %s100 = int_to_ptr.vmem [resolvable:$true] %s99
      %102 = dma.vmem_to_hbm [thread:$0]  %s100, 32, %s3, [#allocation3]
    $region21: #{tpu_custom_call.1} parent=1 // pred_fallthru
      _
    // Predicated region
    $region22: #{tpu_custom_call.1} parent=1 // pred_check
      _
    $region23: #{tpu_custom_call.1} parent=1 // pred_check_branch
      %104 = sbr.rel (0) target = $region25
    $region24: #{tpu_custom_call.1} parent=1 // pred_region
      %105 = dma.done [#allocation3], 32
    $region25: #{tpu_custom_call.1} parent=1 // pred_fallthru
      _
    %106 = vsyncpa [#allocation3], 1
    %107 = vsyncpa [#allocation4], 1

</llo_original>
